<compile_context>
chip_gen: v5e
topology: v5e:2x2
jax: 0.10.0
libtpu: 0.0.40
codegen_flags: <defaults>
</compile_context>

<pallas_src>
import functools

import jax
import jax.numpy as jnp
from jax.experimental import pallas as pl
from jax.experimental.pallas import tpu as pltpu

HIDDEN = 256
LANE = 128


def ddpg_actor_kernel(x_ref, w1_ref, b1_ref, w2_ref, b2_ref, w3_ref, b3_ref,
                      out_ref):
    """Fused 3-layer MLP: tanh(relu(relu(x@W1+b1)@W2+b2)@W3+b3).

    Matmuls run with bf16 operands and f32 MXU accumulation; bias/ReLU math is
    f32; the store is bf16 into a lane-dense 128-wide padded output.
    """
    # In-kernel bf16 cast of the (b_tile, in_dim) input (K=13 is padded by the
    # MXU internally).
    x = x_ref[...].astype(jnp.bfloat16)

    # Layer 1.
    h1 = jnp.dot(x, w1_ref[...], preferred_element_type=jnp.float32)
    h1 = jnp.maximum(h1 + b1_ref[...], 0.0).astype(jnp.bfloat16)

    # Layer 2.
    h2 = jnp.dot(h1, w2_ref[...], preferred_element_type=jnp.float32)
    h2 = jnp.maximum(h2 + b2_ref[...], 0.0).astype(jnp.bfloat16)

    # Layer 3 + tanh (EUP slot); lane-dense padded (b_tile, 128) bf16 store.
    h3 = jnp.dot(h2, w3_ref[...], preferred_element_type=jnp.float32)
    out_ref[...] = jnp.tanh(h3 + b3_ref[...]).astype(out_ref.dtype)


def _choose_batch_tiling(B):
    """Pick (b_tile, n_tiles): tile rounded to the sublane multiple (8),
    batch-padding waste <= 7 rows/tile, and >= 2 grid steps for training-sized
    batches so v7x's two TensorCores can both be used ("parallel" axis)."""
    if B <= 8:
        return 8, 1
    n_tiles = max(1, -(-B // 512))          # target ~512 rows per tile
    if B >= 64:
        n_tiles = max(n_tiles, 2)           # let both v7x TCs get work
    b_tile = ((-(-B // n_tiles) + 7) // 8) * 8
    return b_tile, n_tiles


@functools.partial(jax.jit, static_argnames=("act_dim",))
def ddpg_actor_forward(x, padded_params, *, act_dim):
    """x: (B, obs+goal) float32. Returns (B, act_dim) float32."""
    w1, b1, w2, b2, w3, b3 = padded_params
    B, in_dim = x.shape
    hidden = w1.shape[1]       # 256
    out_pad = w3.shape[1]      # 128 (lane-dense padded action dim)

    b_tile, n_tiles = _choose_batch_tiling(B)
    b_pad = b_tile * n_tiles

    # Only a tiny batch-dim zero pad (<= 7 rows/tile); no feature-dim pad and
    # no host-side dtype cast of x.
    x_b = x if b_pad == B else jnp.pad(x, ((0, b_pad - B), (0, 0)))

    flops = 2 * b_pad * (in_dim * hidden + hidden * hidden + hidden * out_pad)
    bytes_accessed = (
        b_pad * in_dim * 4                                   # x (f32)
        + b_pad * out_pad * 2                                # out (bf16)
        + (in_dim * hidden + hidden * hidden + hidden * out_pad) * 2  # weights
        + (hidden + hidden + out_pad) * 4)                   # biases

    out = pl.pallas_call(
        ddpg_actor_kernel,
        out_shape=jax.ShapeDtypeStruct((b_pad, out_pad), jnp.bfloat16),
        grid_spec=pltpu.PrefetchScalarGridSpec(
            num_scalar_prefetch=0,
            grid=(n_tiles,),
            in_specs=[
                # x: tiled over the batch grid axis (auto double-buffered).
                pl.BlockSpec((b_tile, in_dim), lambda i: (i, 0)),
                # Weights / biases: constant index_map -> resident in VMEM.
                pl.BlockSpec((in_dim, hidden), lambda i: (0, 0)),
                pl.BlockSpec((1, hidden), lambda i: (0, 0)),
                pl.BlockSpec((hidden, hidden), lambda i: (0, 0)),
                pl.BlockSpec((1, hidden), lambda i: (0, 0)),
                pl.BlockSpec((hidden, out_pad), lambda i: (0, 0)),
                pl.BlockSpec((1, out_pad), lambda i: (0, 0)),
            ],
            out_specs=pl.BlockSpec((b_tile, out_pad), lambda i: (i, 0)),
        ),
        compiler_params=pltpu.CompilerParams(
            dimension_semantics=("parallel",)),
        cost_estimate=pl.CostEstimate(
            flops=flops,
            transcendentals=b_pad * out_pad,
            bytes_accessed=bytes_accessed),
    )(x_b, w1, b1, w2, b2, w3, b3)

    # Tiny slice + cast back to f32 for the caller.
    return out[:B, :act_dim].astype(jnp.float32)


def init_params(key, input_dim, hidden_dim, output_dim):
    """Deterministic f32 init mimicking PyTorch's default Linear init
    (uniform(-1/sqrt(fan_in), 1/sqrt(fan_in))). Weights stored as (in, out)."""
    def linear(key, fan_in, fan_out):
        kw, kb = jax.random.split(key)
        bound = 1.0 / jnp.sqrt(jnp.float32(fan_in))
        w = jax.random.uniform(kw, (fan_in, fan_out), jnp.float32, -bound, bound)
        b = jax.random.uniform(kb, (1, fan_out), jnp.float32, -bound, bound)
        return w, b

    k1, k2, k3 = jax.random.split(key, 3)
    w1, b1 = linear(k1, input_dim, hidden_dim)
    w2, b2 = linear(k2, hidden_dim, hidden_dim)
    w3, b3 = linear(k3, hidden_dim, output_dim)
    return (w1, b1, w2, b2, w3, b3)


def prepare_params(params, out_pad=LANE):
    """Cast weights to bf16 (MXU-native) and zero-pad only the action dim
    (4 -> 128) so the final matmul + output store are lane-dense.  w1 keeps
    its natural (in_dim, 256) shape (block == full array dims is layout-legal)
    and biases stay f32 (f32 elementwise epilogue, esp. on v5e)."""
    w1, b1, w2, b2, w3, b3 = params
    hidden = w1.shape[1]
    act_dim = w3.shape[1]

    w3p = jnp.zeros((hidden, out_pad), jnp.bfloat16)
    w3p = w3p.at[:, :act_dim].set(w3.astype(jnp.bfloat16))
    b3p = jnp.zeros((1, out_pad), jnp.float32)
    b3p = b3p.at[:, :act_dim].set(b3)

    return (w1.astype(jnp.bfloat16), b1,
            w2.astype(jnp.bfloat16), b2,
            w3p, b3p)


def reference_forward(x, params):
    """Pure-JAX f32 reference of the PyTorch forward, for verification."""
    w1, b1, w2, b2, w3, b3 = params
    h = jnp.maximum(x @ w1 + b1, 0.0)
    h = jnp.maximum(h @ w2 + b2, 0.0)
    return jnp.tanh(h @ w3 + b3)


if __name__ == "__main__":
    # env_params: obs=10, goal=3, action=4  ->  input_dim=13, hidden=256
    env_params = {"obs": 10, "goal": 3, "action": 4}
    input_dim = env_params["obs"] + env_params["goal"]
    output_dim = env_params["action"]

    key = jax.random.PRNGKey(0)
    k_params, k_x1, k_x2 = jax.random.split(key, 3)
    params = init_params(k_params, input_dim, HIDDEN, output_dim)
    padded_params = prepare_params(params)

    # Small batch: single 8-row tile, grid=(1,).
    x_small = jax.random.normal(k_x1, (2, input_dim), jnp.float32)
    out_small = jax.block_until_ready(
        ddpg_actor_forward(x_small, padded_params, act_dim=output_dim))
    ref_small = reference_forward(x_small, params)
    assert out_small.shape == (2, output_dim)
    # bf16 matmul operands + bf16 output store -> ~1e-2 level deviation.
    assert jnp.allclose(out_small, ref_small, atol=3e-2, rtol=0.0), \
        "small-batch mismatch vs f32 reference"

    # Larger batch: grid=(2,) with 152-row tiles, only 4 rows of batch pad.
    x_big = jax.random.normal(k_x2, (300, input_dim), jnp.float32)
    out_big = jax.block_until_ready(
        ddpg_actor_forward(x_big, padded_params, act_dim=output_dim))
    ref_big = reference_forward(x_big, params)
    assert out_big.shape == (300, output_dim)
    assert jnp.allclose(out_big, ref_big, atol=3e-2, rtol=0.0), \
        "large-batch mismatch vs f32 reference"

    print("KERNEL_OK")
</pallas_src>

<mosaic_0001>
module attributes {stable_mosaic.version = 11 : i64} {
  func.func @ddpg_actor_kernel(%arg0: i32, %arg1: memref<8x13xf32, #tpu.memory_space<vmem>>, %arg2: memref<13x256xbf16, #tpu.memory_space<vmem>>, %arg3: memref<1x256xf32, #tpu.memory_space<vmem>>, %arg4: memref<256x256xbf16, #tpu.memory_space<vmem>>, %arg5: memref<1x256xf32, #tpu.memory_space<vmem>>, %arg6: memref<256x128xbf16, #tpu.memory_space<vmem>>, %arg7: memref<1x128xf32, #tpu.memory_space<vmem>>, %arg8: memref<8x128xbf16, #tpu.memory_space<vmem>>) attributes {dimension_semantics = [#tpu.dimension_semantics<parallel>], iteration_bounds = array<i64: 1>, scalar_prefetch = 0 : i64, scratch_operands = 0 : i64, tpu.core_type = #tpu.core_type<tc>, window_params = [{transform_indices = @transform_0, window_bounds = array<i64: 8, 13>}, {pipeline_mode = #tpu.pipeline_mode<synchronous>, transform_indices = @transform_1, window_bounds = array<i64: 13, 256>}, {pipeline_mode = #tpu.pipeline_mode<synchronous>, transform_indices = @transform_2, window_bounds = array<i64: 1, 256>}, {pipeline_mode = #tpu.pipeline_mode<synchronous>, transform_indices = @transform_3, window_bounds = array<i64: 256, 256>}, {pipeline_mode = #tpu.pipeline_mode<synchronous>, transform_indices = @transform_4, window_bounds = array<i64: 1, 256>}, {pipeline_mode = #tpu.pipeline_mode<synchronous>, transform_indices = @transform_5, window_bounds = array<i64: 256, 128>}, {pipeline_mode = #tpu.pipeline_mode<synchronous>, transform_indices = @transform_6, window_bounds = array<i64: 1, 128>}, {transform_indices = @transform_7, window_bounds = array<i64: 8, 128>}]} {
    %c0 = arith.constant 0 : index
    %c0_0 = arith.constant 0 : index
    %0 = vector.load %arg1[%c0, %c0_0] : memref<8x13xf32, #tpu.memory_space<vmem>>, vector<8x13xf32>
    %1 = arith.truncf %0 : vector<8x13xf32> to vector<8x13xbf16>
    %c0_1 = arith.constant 0 : index
    %c0_2 = arith.constant 0 : index
    %2 = vector.load %arg2[%c0_1, %c0_2] : memref<13x256xbf16, #tpu.memory_space<vmem>>, vector<13x256xbf16>
    %cst = arith.constant dense<0.000000e+00> : vector<8x256xf32>
    %3 = tpu.matmul %1, %2, %cst {dimension_numbers = #tpu.dot_dimension_numbers<[1], [0], [0], [1], [0, 0, 1, 1], [], []>} : vector<8x13xbf16>, vector<13x256xbf16>, vector<8x256xf32> -> vector<8x256xf32>
    %c0_3 = arith.constant 0 : index
    %c0_4 = arith.constant 0 : index
    %4 = vector.load %arg3[%c0_3, %c0_4] : memref<1x256xf32, #tpu.memory_space<vmem>>, vector<1x256xf32>
    %5 = vector.broadcast %4 : vector<1x256xf32> to vector<8x256xf32>
    %6 = arith.addf %3, %5 : vector<8x256xf32>
    %cst_5 = arith.constant 0.000000e+00 : f32
    %7 = vector.broadcast %cst_5 : f32 to vector<8x256xf32>
    %8 = arith.maximumf %6, %7 : vector<8x256xf32>
    %9 = arith.truncf %8 : vector<8x256xf32> to vector<8x256xbf16>
    %c0_6 = arith.constant 0 : index
    %c0_7 = arith.constant 0 : index
    %10 = vector.load %arg4[%c0_6, %c0_7] : memref<256x256xbf16, #tpu.memory_space<vmem>>, vector<256x256xbf16>
    %cst_8 = arith.constant dense<0.000000e+00> : vector<8x256xf32>
    %11 = tpu.matmul %9, %10, %cst_8 {dimension_numbers = #tpu.dot_dimension_numbers<[1], [0], [0], [1], [0, 0, 1, 1], [], []>} : vector<8x256xbf16>, vector<256x256xbf16>, vector<8x256xf32> -> vector<8x256xf32>
    %c0_9 = arith.constant 0 : index
    %c0_10 = arith.constant 0 : index
    %12 = vector.load %arg5[%c0_9, %c0_10] : memref<1x256xf32, #tpu.memory_space<vmem>>, vector<1x256xf32>
    %13 = vector.broadcast %12 : vector<1x256xf32> to vector<8x256xf32>
    %14 = arith.addf %11, %13 : vector<8x256xf32>
    %cst_11 = arith.constant 0.000000e+00 : f32
    %15 = vector.broadcast %cst_11 : f32 to vector<8x256xf32>
    %16 = arith.maximumf %14, %15 : vector<8x256xf32>
    %17 = arith.truncf %16 : vector<8x256xf32> to vector<8x256xbf16>
    %c0_12 = arith.constant 0 : index
    %c0_13 = arith.constant 0 : index
    %18 = vector.load %arg6[%c0_12, %c0_13] : memref<256x128xbf16, #tpu.memory_space<vmem>>, vector<256x128xbf16>
    %cst_14 = arith.constant dense<0.000000e+00> : vector<8x128xf32>
    %19 = tpu.matmul %17, %18, %cst_14 {dimension_numbers = #tpu.dot_dimension_numbers<[1], [0], [0], [1], [0, 0, 1, 1], [], []>} : vector<8x256xbf16>, vector<256x128xbf16>, vector<8x128xf32> -> vector<8x128xf32>
    %c0_15 = arith.constant 0 : index
    %c0_16 = arith.constant 0 : index
    %20 = vector.load %arg7[%c0_15, %c0_16] : memref<1x128xf32, #tpu.memory_space<vmem>>, vector<1x128xf32>
    %21 = vector.broadcast %20 : vector<1x128xf32> to vector<8x128xf32>
    %22 = arith.addf %19, %21 : vector<8x128xf32>
    %23 = math.tanh %22 : vector<8x128xf32>
    %24 = arith.truncf %23 : vector<8x128xf32> to vector<8x128xbf16>
    %c0_17 = arith.constant 0 : index
    %c0_18 = arith.constant 0 : index
    %25 = vector.load %arg8[%c0_17, %c0_18] : memref<8x128xbf16, #tpu.memory_space<vmem>>, vector<8x128xbf16>
    tpu.vector_store %arg8[%c0_17, %c0_18], %24 {strides = array<i32>} : memref<8x128xbf16, #tpu.memory_space<vmem>>, vector<8x128xbf16>,
    return
  }
  func.func @transform_0(%arg0: i32) -> (i32, i32) {
    %c0_i32 = arith.constant 0 : i32
    %c0_i32_0 = arith.constant 0 : i32
    return %arg0, %c0_i32 : i32, i32
  }
  func.func @transform_1(%arg0: i32) -> (i32, i32) {
    %c0_i32 = arith.constant 0 : i32
    %c0_i32_0 = arith.constant 0 : i32
    %c0_i32_1 = arith.constant 0 : i32
    return %c0_i32, %c0_i32_0 : i32, i32
  }
  func.func @transform_2(%arg0: i32) -> (i32, i32) {
    %c0_i32 = arith.constant 0 : i32
    %c0_i32_0 = arith.constant 0 : i32
    %c0_i32_1 = arith.constant 0 : i32
    return %c0_i32, %c0_i32_0 : i32, i32
  }
  func.func @transform_3(%arg0: i32) -> (i32, i32) {
    %c0_i32 = arith.constant 0 : i32
    %c0_i32_0 = arith.constant 0 : i32
    %c0_i32_1 = arith.constant 0 : i32
    return %c0_i32, %c0_i32_0 : i32, i32
  }
  func.func @transform_4(%arg0: i32) -> (i32, i32) {
    %c0_i32 = arith.constant 0 : i32
    %c0_i32_0 = arith.constant 0 : i32
    %c0_i32_1 = arith.constant 0 : i32
    return %c0_i32, %c0_i32_0 : i32, i32
  }
  func.func @transform_5(%arg0: i32) -> (i32, i32) {
    %c0_i32 = arith.constant 0 : i32
    %c0_i32_0 = arith.constant 0 : i32
    %c0_i32_1 = arith.constant 0 : i32
    return %c0_i32, %c0_i32_0 : i32, i32
  }
  func.func @transform_6(%arg0: i32) -> (i32, i32) {
    %c0_i32 = arith.constant 0 : i32
    %c0_i32_0 = arith.constant 0 : i32
    %c0_i32_1 = arith.constant 0 : i32
    return %c0_i32, %c0_i32_0 : i32, i32
  }
  func.func @transform_7(%arg0: i32) -> (i32, i32) {
    %c0_i32 = arith.constant 0 : i32
    %c0_i32_0 = arith.constant 0 : i32
    return %arg0, %c0_i32 : i32, i32
  }
}

</mosaic_0001>

<llo_original>
// kernel: ddpg_actor_forward.1
$region0: #{ddpg_actor_forward.1}
  #allocation0 [shape = 'u32[]', space=smem, size = 0x4, offset = 0x4, fixed_abs, tag = 'smem constant byte address 0x4 - core index']
  #allocation1 [shape = 'u32[72,128]{1,0:T(1,128)}', space=vmem, size = 0x9000, scoped, tag = 'internal scratch']
  %s0 = inlined_call_operand.vmem [shape: f32[8,13], index: 0, kind: input, shape index: {}]
  %s1 = inlined_call_operand.hbm [shape: bf16[13,256], index: 1, kind: input, shape index: {}]
  %s2 = inlined_call_operand.vmem [shape: f32[1,256], index: 2, kind: input, shape index: {}]
  %s3 = inlined_call_operand.hbm [shape: bf16[256,256], index: 3, kind: input, shape index: {}]
  %s4 = inlined_call_operand.vmem [shape: f32[1,256], index: 4, kind: input, shape index: {}]
  %s5 = inlined_call_operand.hbm [shape: bf16[256,128], index: 5, kind: input, shape index: {}]
  %s6 = inlined_call_operand.vmem [shape: f32[1,128], index: 6, kind: input, shape index: {}]
  %s7 = inlined_call_operand.vmem [shape: bf16[8,128], index: 7, kind: output, shape index: {}]
  %s8 = sld [smem:[#allocation0]]
  $region50: #{ddpg_actor_forward.1} parent=0
    _
  %s10 = ssub.s32 1, %s8
  %s11 = scalar_select 0, %s10, %s8
  $region1: #{ddpg_actor_forward.1} parent=0
    #allocation2 [shape = 'u8[8192]{0}', space=vmem, size = 0x2000, scoped, tag = 'input window, operand 1, single buffered']
    #allocation3 [shape = 's32[1]{0}', space=sflag, size = 0x4, scoped, tag = 'scoped memory for ddpg_actor_forward.1']
    #allocation4 [shape = 'u8[131072]{0}', space=vmem, size = 0x20000, scoped, tag = 'input window, operand 3, single buffered']
    #allocation5 [shape = 's32[1]{0}', space=sflag, size = 0x4, scoped, tag = 'scoped memory for ddpg_actor_forward.1']
    #allocation6 [shape = 'u8[65536]{0}', space=vmem, size = 0x10000, scoped, tag = 'input window, operand 5, single buffered']
    %12 = vsyncpa [#allocation3], 0
    %13 = vsyncpa [#allocation5], 0
    // Predicated region
    $region2: #{ddpg_actor_forward.1} parent=1 // pred_check
      _
    $region3: #{ddpg_actor_forward.1} parent=1 // pred_check_branch
      %15 = sbr.rel (0) target = $region5
    $region4: #{ddpg_actor_forward.1} parent=1 // pred_region
      _
    $region5: #{ddpg_actor_forward.1} parent=1 // pred_fallthru
      _
    // Predicated region
    $region6: #{ddpg_actor_forward.1} parent=1 // pred_check
      _
    $region7: #{ddpg_actor_forward.1} parent=1 // pred_check_branch
      %17 = sbr.rel (0) target = $region9
    $region8: #{ddpg_actor_forward.1} parent=1 // pred_region
      %19 = vsyncadd [#allocation3], 0
      %s20 = sshll.u32 %s1, 4
      %s21 = int_to_ptr.hbm [resolvable:$true] %s20
      %s22 = sshll.u32 [#allocation2], 4
      %s23 = int_to_ptr.vmem [resolvable:$true] %s22
      %28 = dma.hbm_to_vmem [thread:$0]  %s21, 256, %s23, [#allocation3], 128, 128, 8
    $region9: #{ddpg_actor_forward.1} parent=1 // pred_fallthru
      _
    // Predicated region
    $region10: #{ddpg_actor_forward.1} parent=1 // pred_check
      _
    $region11: #{ddpg_actor_forward.1} parent=1 // pred_check_branch
      %30 = sbr.rel (0) target = $region13
    $region12: #{ddpg_actor_forward.1} parent=1 // pred_region
      _
    $region13: #{ddpg_actor_forward.1} parent=1 // pred_fallthru
      _
    // Predicated region
    $region14: #{ddpg_actor_forward.1} parent=1 // pred_check
      _
    $region15: #{ddpg_actor_forward.1} parent=1 // pred_check_branch
      %32 = sbr.rel (0) target = $region17
    $region16: #{ddpg_actor_forward.1} parent=1 // pred_region
      %34 = vsyncadd [#allocation5], 0
      %s35 = sshll.u32 %s3, 4
      %s36 = int_to_ptr.hbm [resolvable:$true] %s35
      %s37 = sshll.u32 [#allocation4], 4
      %s38 = int_to_ptr.vmem [resolvable:$true] %s37
      %43 = dma.hbm_to_vmem [thread:$0]  %s36, 4096, %s38, [#allocation5], 128, 128, 8
    $region17: #{ddpg_actor_forward.1} parent=1 // pred_fallthru
      _
    // Predicated region
    $region18: #{ddpg_actor_forward.1} parent=1 // pred_check
      _
    $region19: #{ddpg_actor_forward.1} parent=1 // pred_check_branch
      %45 = sbr.rel (0) target = $region21
    $region20: #{ddpg_actor_forward.1} parent=1 // pred_region
      _
    $region21: #{ddpg_actor_forward.1} parent=1 // pred_fallthru
      _
    // Predicated region
    $region22: #{ddpg_actor_forward.1} parent=1 // pred_check
      _
    $region23: #{ddpg_actor_forward.1} parent=1 // pred_check_branch
      %47 = sbr.rel (0) target = $region25
    $region24: #{ddpg_actor_forward.1} parent=1 // pred_region
      %49 = vsyncadd [#allocation5], 0
      %s50 = sshll.u32 %s5, 4
      %s51 = int_to_ptr.hbm [resolvable:$true] %s50
      %s52 = sshll.u32 [#allocation6], 4
      %s53 = int_to_ptr.vmem [resolvable:$true] %s52
      %58 = dma.hbm_to_vmem [thread:$0]  %s51, 2048, %s53, [#allocation5], 64, 64, 4
    $region25: #{ddpg_actor_forward.1} parent=1 // pred_fallthru
      _
    // Predicated region
    $region26: #{ddpg_actor_forward.1} parent=1 // pred_check
      _
    $region27: #{ddpg_actor_forward.1} parent=1 // pred_check_branch
      %60 = sbr.rel (0) target = $region29
    $region28: #{ddpg_actor_forward.1} parent=1 // pred_region
      _
    $region29: #{ddpg_actor_forward.1} parent=1 // pred_fallthru
      _
    // Predicated region
    $region30: #{ddpg_actor_forward.1} parent=1 // pred_check
      _
    $region31: #{ddpg_actor_forward.1} parent=1 // pred_check_branch
      %62 = sbr.rel (0) target = $region33
    $region32: #{ddpg_actor_forward.1} parent=1 // pred_region
      %64 = dma.done [#allocation3], 256
    $region33: #{ddpg_actor_forward.1} parent=1 // pred_fallthru
      _
    // Predicated region
    $region34: #{ddpg_actor_forward.1} parent=1 // pred_check
      _
    $region35: #{ddpg_actor_forward.1} parent=1 // pred_check_branch
      %66 = sbr.rel (0) target = $region37
    $region36: #{ddpg_actor_forward.1} parent=1 // pred_region
      %68 = dma.done [#allocation5], 4096
    $region37: #{ddpg_actor_forward.1} parent=1 // pred_fallthru
      _
    // Predicated region
    $region38: #{ddpg_actor_forward.1} parent=1 // pred_check
      _
    $region39: #{ddpg_actor_forward.1} parent=1 // pred_check_branch
      %70 = sbr.rel (0) target = $region41
    $region40: #{ddpg_actor_forward.1} parent=1 // pred_region
      %72 = dma.done [#allocation5], 2048
    $region41: #{ddpg_actor_forward.1} parent=1 // pred_fallthru
      _
    %v74 = vld [vmem:[%s0] sm:$0xff]
    %v75 = vpack.c.bf16 %v74, %v74
    %v76 = vld [vmem:[#allocation2] sm:$0xff]
    %v77 = vld [vmem:[#allocation2 + $0x8] sm:$0x77]
    %v78 = vld [vmem:[%s2] sm:$0x3]
    %v80 = vperm.slane %v78, 0
    %v81 = vperm.slane %v78, 1
    %v86 = vunpack.c.l.b16 %v76
    %v87 = vunpack.c.h.b16 %v76
    %v88 = vunpack.c.l.b16 %v77
    %v89 = vunpack.c.h.b16 %v77
    %v90 = vpack.c.b16 %v88, %v86
    %v91 = vpack.c.b16 %v89, %v87
    %vm92 = vcmask 105472
    %v94 = vsel %vm92, %v75, 0
    %vm96 = vcmask 1045504
    %vm97 = vcmask 1046528
    %v98 = vsel %vm96, 4294967295, 65535
    %v99 = vsel %vm97, %v98, 0
    %v101 = vand.u32 %v90, %v99
    %v104 = vand.u32 %v91, %v99
    %106 = vmatpush.bf16.msra.mxu0 0
    %107 = vmatpush.bf16.msra.mxu0 0
    %108 = vmatpush.bf16.msra.mxu0 0
    %109 = vmatpush.bf16.msra.mxu0 0
    %110 = vmatpush.bf16.msra.mxu0 0
    %111 = vmatpush.bf16.msra.mxu0 0
    %112 = vmatpush.bf16.msra.mxu0 0
    %113 = vmatpush.bf16.msra.mxu0 %v101
    %114 = vmatmul.bf16.gmra.mxu0 %v94
    %v115 = vpop.f32.mrf.mxu0
    %v116 = vadd.f32 %v80, %v115
    %v117 = vpop.f32.mrf.mxu0
    %118 = vdwg.mxu0
    %119 = vmatpush.bf16.msra.mxu0 0
    %120 = vmatpush.bf16.msra.mxu0 0
    %121 = vmatpush.bf16.msra.mxu0 0
    %122 = vmatpush.bf16.msra.mxu0 0
    %123 = vmatpush.bf16.msra.mxu0 0
    %124 = vmatpush.bf16.msra.mxu0 0
    %125 = vmatpush.bf16.msra.mxu0 0
    %126 = vmatpush.bf16.msra.mxu0 %v104
    %127 = vmatmul.bf16.gmra.mxu0 %v94
    %v128 = vpop.f32.mrf.mxu0
    %v129 = vadd.f32 %v81, %v128
    %v130 = vpop.f32.mrf.mxu0
    %131 = vdwg.mxu0
    %v132 = vmax.f32 %v116, 0.0
    %v133 = vmax.f32 %v129, 0.0
    %v134 = vpack.c.bf16 %v132, %v132
    %v135 = vpack.c.bf16 %v133, %v133
    %v136 = vld [vmem:[#allocation4] sm:$0xff]
    %v137 = vld [vmem:[#allocation4 + $0x8] sm:$0xff]
    %v138 = vld [vmem:[#allocation4 + $0x10] sm:$0xff]
    %v139 = vld [vmem:[#allocation4 + $0x18] sm:$0xff]
    %v140 = vld [vmem:[#allocation4 + $0x20] sm:$0xff]
    %v141 = vld [vmem:[#allocation4 + $0x28] sm:$0xff]
    %v142 = vld [vmem:[#allocation4 + $0x30] sm:$0xff]
    %v143 = vld [vmem:[#allocation4 + $0x38] sm:$0xff]
    %v144 = vld [vmem:[#allocation4 + $0x40] sm:$0xff]
    %v145 = vld [vmem:[#allocation4 + $0x48] sm:$0xff]
    %v146 = vld [vmem:[#allocation4 + $0x50] sm:$0xff]
    %v147 = vld [vmem:[#allocation4 + $0x58] sm:$0xff]
    %v148 = vld [vmem:[#allocation4 + $0x60] sm:$0xff]
    %v149 = vld [vmem:[#allocation4 + $0x68] sm:$0xff]
    %v150 = vld [vmem:[#allocation4 + $0x70] sm:$0xff]
    %v151 = vld [vmem:[#allocation4 + $0x78] sm:$0xff]
    %v152 = vld [vmem:[#allocation4 + $0x80] sm:$0xff]
    %v153 = vld [vmem:[#allocation4 + $0x88] sm:$0xff]
    %v154 = vld [vmem:[#allocation4 + $0x90] sm:$0xff]
    %v155 = vld [vmem:[#allocation4 + $0x98] sm:$0xff]
    %v156 = vld [vmem:[#allocation4 + $0xa0] sm:$0xff]
    %v157 = vld [vmem:[#allocation4 + $0xa8] sm:$0xff]
    %v158 = vld [vmem:[#allocation4 + $0xb0] sm:$0xff]
    %v159 = vld [vmem:[#allocation4 + $0xb8] sm:$0xff]
    %v160 = vld [vmem:[#allocation4 + $0xc0] sm:$0xff]
    %v161 = vld [vmem:[#allocation4 + $0xc8] sm:$0xff]
    %v162 = vld [vmem:[#allocation4 + $0xd0] sm:$0xff]
    %v163 = vld [vmem:[#allocation4 + $0xd8] sm:$0xff]
    %v164 = vld [vmem:[#allocation4 + $0xe0] sm:$0xff]
    %v165 = vld [vmem:[#allocation4 + $0xe8] sm:$0xff]
    %v166 = vld [vmem:[#allocation4 + $0xf0] sm:$0xff]
    %v167 = vld [vmem:[#allocation4 + $0xf8] sm:$0xff]
    %v168 = vld [vmem:[%s4] sm:$0x3]
    %v170 = vperm.slane %v168, 0
    %v171 = vperm.slane %v168, 1
    %v206 = vunpack.c.l.b16 %v136
    %v207 = vunpack.c.h.b16 %v136
    %v208 = vunpack.c.l.b16 %v137
    %v209 = vunpack.c.h.b16 %v137
    %v210 = vunpack.c.l.b16 %v138
    %v211 = vunpack.c.h.b16 %v138
    %v212 = vunpack.c.l.b16 %v139
    %v213 = vunpack.c.h.b16 %v139
    %v214 = vunpack.c.l.b16 %v140
    %v215 = vunpack.c.h.b16 %v140
    %v216 = vunpack.c.l.b16 %v141
    %v217 = vunpack.c.h.b16 %v141
    %v218 = vunpack.c.l.b16 %v142
    %v219 = vunpack.c.h.b16 %v142
    %v220 = vunpack.c.l.b16 %v143
    %v221 = vunpack.c.h.b16 %v143
    %v222 = vunpack.c.l.b16 %v144
    %v223 = vunpack.c.h.b16 %v144
    %v224 = vunpack.c.l.b16 %v145
    %v225 = vunpack.c.h.b16 %v145
    %v226 = vunpack.c.l.b16 %v146
    %v227 = vunpack.c.h.b16 %v146
    %v228 = vunpack.c.l.b16 %v147
    %v229 = vunpack.c.h.b16 %v147
    %v230 = vunpack.c.l.b16 %v148
    %v231 = vunpack.c.h.b16 %v148
    %v232 = vunpack.c.l.b16 %v149
    %v233 = vunpack.c.h.b16 %v149
    %v234 = vunpack.c.l.b16 %v150
    %v235 = vunpack.c.h.b16 %v150
    %v236 = vunpack.c.l.b16 %v151
    %v237 = vunpack.c.h.b16 %v151
    %v238 = vunpack.c.l.b16 %v152
    %v239 = vunpack.c.h.b16 %v152
    %v240 = vunpack.c.l.b16 %v153
    %v241 = vunpack.c.h.b16 %v153
    %v242 = vunpack.c.l.b16 %v154
    %v243 = vunpack.c.h.b16 %v154
    %v244 = vunpack.c.l.b16 %v155
    %v245 = vunpack.c.h.b16 %v155
    %v246 = vunpack.c.l.b16 %v156
    %v247 = vunpack.c.h.b16 %v156
    %v248 = vunpack.c.l.b16 %v157
    %v249 = vunpack.c.h.b16 %v157
    %v250 = vunpack.c.l.b16 %v158
    %v251 = vunpack.c.h.b16 %v158
    %v252 = vunpack.c.l.b16 %v159
    %v253 = vunpack.c.h.b16 %v159
    %v254 = vunpack.c.l.b16 %v160
    %v255 = vunpack.c.h.b16 %v160
    %v256 = vunpack.c.l.b16 %v161
    %v257 = vunpack.c.h.b16 %v161
    %v258 = vunpack.c.l.b16 %v162
    %v259 = vunpack.c.h.b16 %v162
    %v260 = vunpack.c.l.b16 %v163
    %v261 = vunpack.c.h.b16 %v163
    %v262 = vunpack.c.l.b16 %v164
    %v263 = vunpack.c.h.b16 %v164
    %v264 = vunpack.c.l.b16 %v165
    %v265 = vunpack.c.h.b16 %v165
    %v266 = vunpack.c.l.b16 %v166
    %v267 = vunpack.c.h.b16 %v166
    %v268 = vunpack.c.l.b16 %v167
    %v269 = vunpack.c.h.b16 %v167
    %v270 = vpack.c.b16 %v208, %v206
    %v271 = vpack.c.b16 %v209, %v207
    %v272 = vpack.c.b16 %v212, %v210
    %v273 = vpack.c.b16 %v213, %v211
    %v274 = vpack.c.b16 %v216, %v214
    %v275 = vpack.c.b16 %v217, %v215
    %v276 = vpack.c.b16 %v220, %v218
    %v277 = vpack.c.b16 %v221, %v219
    %v278 = vpack.c.b16 %v224, %v222
    %v279 = vpack.c.b16 %v225, %v223
    %v280 = vpack.c.b16 %v228, %v226
    %v281 = vpack.c.b16 %v229, %v227
    %v282 = vpack.c.b16 %v232, %v230
    %v283 = vpack.c.b16 %v233, %v231
    %v284 = vpack.c.b16 %v236, %v234
    %v285 = vpack.c.b16 %v237, %v235
    %v286 = vpack.c.b16 %v240, %v238
    %v287 = vpack.c.b16 %v241, %v239
    %v288 = vpack.c.b16 %v244, %v242
    %v289 = vpack.c.b16 %v245, %v243
    %v290 = vpack.c.b16 %v248, %v246
    %v291 = vpack.c.b16 %v249, %v247
    %v292 = vpack.c.b16 %v252, %v250
    %v293 = vpack.c.b16 %v253, %v251
    %v294 = vpack.c.b16 %v256, %v254
    %v295 = vpack.c.b16 %v257, %v255
    %v296 = vpack.c.b16 %v260, %v258
    %v297 = vpack.c.b16 %v261, %v259
    %v298 = vpack.c.b16 %v264, %v262
    %v299 = vpack.c.b16 %v265, %v263
    %v300 = vpack.c.b16 %v268, %v266
    %v301 = vpack.c.b16 %v269, %v267
    %334 = vmatpush.bf16.msra.mxu0 %v284
    %335 = vmatpush.bf16.msra.mxu0 %v282
    %336 = vmatpush.bf16.msra.mxu0 %v280
    %337 = vmatpush.bf16.msra.mxu0 %v278
    %338 = vmatpush.bf16.msra.mxu0 %v276
    %339 = vmatpush.bf16.msra.mxu0 %v274
    %340 = vmatpush.bf16.msra.mxu0 %v272
    %341 = vmatpush.bf16.msra.mxu0 %v270
    %342 = vmatmul.bf16.gmra.mxu0 %v134
    %v343 = vpop.f32.mrf.mxu0
    %v344 = vadd.f32 %v170, %v343
    %v345 = vpop.f32.mrf.mxu0
    %346 = vdwg.mxu0
    %347 = vmatpush.bf16.msra.mxu0 %v300
    %348 = vmatpush.bf16.msra.mxu0 %v298
    %349 = vmatpush.bf16.msra.mxu0 %v296
    %350 = vmatpush.bf16.msra.mxu0 %v294
    %351 = vmatpush.bf16.msra.mxu0 %v292
    %352 = vmatpush.bf16.msra.mxu0 %v290
    %353 = vmatpush.bf16.msra.mxu0 %v288
    %354 = vmatpush.bf16.msra.mxu0 %v286
    %355 = vmatmul.bf16.gmra.mxu0 %v135
    %v356 = vpop.f32.mrf.mxu0
    %v357 = vadd.f32 %v344, %v356
    %v358 = vpop.f32.mrf.mxu0
    %359 = vdwg.mxu0
    %360 = vmatpush.bf16.msra.mxu0 %v285
    %361 = vmatpush.bf16.msra.mxu0 %v283
    %362 = vmatpush.bf16.msra.mxu0 %v281
    %363 = vmatpush.bf16.msra.mxu0 %v279
    %364 = vmatpush.bf16.msra.mxu0 %v277
    %365 = vmatpush.bf16.msra.mxu0 %v275
    %366 = vmatpush.bf16.msra.mxu0 %v273
    %367 = vmatpush.bf16.msra.mxu0 %v271
    %368 = vmatmul.bf16.gmra.mxu0 %v134
    %v369 = vpop.f32.mrf.mxu0
    %v370 = vadd.f32 %v171, %v369
    %v371 = vpop.f32.mrf.mxu0
    %372 = vdwg.mxu0
    %373 = vmatpush.bf16.msra.mxu0 %v301
    %374 = vmatpush.bf16.msra.mxu0 %v299
    %375 = vmatpush.bf16.msra.mxu0 %v297
    %376 = vmatpush.bf16.msra.mxu0 %v295
    %377 = vmatpush.bf16.msra.mxu0 %v293
    %378 = vmatpush.bf16.msra.mxu0 %v291
    %379 = vmatpush.bf16.msra.mxu0 %v289
    %380 = vmatpush.bf16.msra.mxu0 %v287
    %381 = vmatmul.bf16.gmra.mxu0 %v135
    %v382 = vpop.f32.mrf.mxu0
    %v383 = vadd.f32 %v370, %v382
    %v384 = vpop.f32.mrf.mxu0
    %385 = vdwg.mxu0
    %v386 = vmax.f32 %v357, 0.0
    %v387 = vmax.f32 %v383, 0.0
    %v388 = vpack.c.bf16 %v386, %v386
    %v389 = vpack.c.bf16 %v387, %v387
    %v390 = vld [vmem:[#allocation6] sm:$0xf]
    %v391 = vld [vmem:[#allocation6 + $0x4] sm:$0xf]
    %v392 = vld [vmem:[#allocation6 + $0x8] sm:$0xf]
    %v393 = vld [vmem:[#allocation6 + $0xc] sm:$0xf]
    %v394 = vld [vmem:[#allocation6 + $0x10] sm:$0xf]
    %v395 = vld [vmem:[#allocation6 + $0x14] sm:$0xf]
    %v396 = vld [vmem:[#allocation6 + $0x18] sm:$0xf]
    %v397 = vld [vmem:[#allocation6 + $0x1c] sm:$0xf]
    %v398 = vld [vmem:[#allocation6 + $0x20] sm:$0xf]
    %v399 = vld [vmem:[#allocation6 + $0x24] sm:$0xf]
    %v400 = vld [vmem:[#allocation6 + $0x28] sm:$0xf]
    %v401 = vld [vmem:[#allocation6 + $0x2c] sm:$0xf]
    %v402 = vld [vmem:[#allocation6 + $0x30] sm:$0xf]
    %v403 = vld [vmem:[#allocation6 + $0x34] sm:$0xf]
    %v404 = vld [vmem:[#allocation6 + $0x38] sm:$0xf]
    %v405 = vld [vmem:[#allocation6 + $0x3c] sm:$0xf]
    %v406 = vld [vmem:[#allocation6 + $0x40] sm:$0xf]
    %v407 = vld [vmem:[#allocation6 + $0x44] sm:$0xf]
    %v408 = vld [vmem:[#allocation6 + $0x48] sm:$0xf]
    %v409 = vld [vmem:[#allocation6 + $0x4c] sm:$0xf]
    %v410 = vld [vmem:[#allocation6 + $0x50] sm:$0xf]
    %v411 = vld [vmem:[#allocation6 + $0x54] sm:$0xf]
    %v412 = vld [vmem:[#allocation6 + $0x58] sm:$0xf]
    %v413 = vld [vmem:[#allocation6 + $0x5c] sm:$0xf]
    %v414 = vld [vmem:[#allocation6 + $0x60] sm:$0xf]
    %v415 = vld [vmem:[#allocation6 + $0x64] sm:$0xf]
    %v416 = vld [vmem:[#allocation6 + $0x68] sm:$0xf]
    %v417 = vld [vmem:[#allocation6 + $0x6c] sm:$0xf]
    %v418 = vld [vmem:[#allocation6 + $0x70] sm:$0xf]
    %v419 = vld [vmem:[#allocation6 + $0x74] sm:$0xf]
    %v420 = vld [vmem:[#allocation6 + $0x78] sm:$0xf]
    %v421 = vld [vmem:[#allocation6 + $0x7c] sm:$0xf]
    %v422 = vld [vmem:[%s6] sm:$0x1]
    %v424 = vperm.slane %v422, 0
    %v458 = vunpack.c.l.b16 %v390
    %v459 = vunpack.c.l.b16 %v391
    %v460 = vunpack.c.l.b16 %v392
    %v461 = vunpack.c.l.b16 %v393
    %v462 = vunpack.c.l.b16 %v394
    %v463 = vunpack.c.l.b16 %v395
    %v464 = vunpack.c.l.b16 %v396
    %v465 = vunpack.c.l.b16 %v397
    %v466 = vunpack.c.l.b16 %v398
    %v467 = vunpack.c.l.b16 %v399
    %v468 = vunpack.c.l.b16 %v400
    %v469 = vunpack.c.l.b16 %v401
    %v470 = vunpack.c.l.b16 %v402
    %v471 = vunpack.c.l.b16 %v403
    %v472 = vunpack.c.l.b16 %v404
    %v473 = vunpack.c.l.b16 %v405
    %v474 = vunpack.c.l.b16 %v406
    %v475 = vunpack.c.l.b16 %v407
    %v476 = vunpack.c.l.b16 %v408
    %v477 = vunpack.c.l.b16 %v409
    %v478 = vunpack.c.l.b16 %v410
    %v479 = vunpack.c.l.b16 %v411
    %v480 = vunpack.c.l.b16 %v412
    %v481 = vunpack.c.l.b16 %v413
    %v482 = vunpack.c.l.b16 %v414
    %v483 = vunpack.c.l.b16 %v415
    %v484 = vunpack.c.l.b16 %v416
    %v485 = vunpack.c.l.b16 %v417
    %v486 = vunpack.c.l.b16 %v418
    %v487 = vunpack.c.l.b16 %v419
    %v488 = vunpack.c.l.b16 %v420
    %v489 = vunpack.c.l.b16 %v421
    %v490 = vpack.c.b16 %v459, %v458
    %v491 = vpack.c.b16 %v461, %v460
    %v492 = vpack.c.b16 %v463, %v462
    %v493 = vpack.c.b16 %v465, %v464
    %v494 = vpack.c.b16 %v467, %v466
    %v495 = vpack.c.b16 %v469, %v468
    %v496 = vpack.c.b16 %v471, %v470
    %v497 = vpack.c.b16 %v473, %v472
    %v498 = vpack.c.b16 %v475, %v474
    %v499 = vpack.c.b16 %v477, %v476
    %v500 = vpack.c.b16 %v479, %v478
    %v501 = vpack.c.b16 %v481, %v480
    %v502 = vpack.c.b16 %v483, %v482
    %v503 = vpack.c.b16 %v485, %v484
    %v504 = vpack.c.b16 %v487, %v486
    %v505 = vpack.c.b16 %v489, %v488
    %522 = vmatpush.bf16.msra.mxu0 %v497
    %523 = vmatpush.bf16.msra.mxu0 %v496
    %524 = vmatpush.bf16.msra.mxu0 %v495
    %525 = vmatpush.bf16.msra.mxu0 %v494
    %526 = vmatpush.bf16.msra.mxu0 %v493
    %527 = vmatpush.bf16.msra.mxu0 %v492
    %528 = vmatpush.bf16.msra.mxu0 %v491
    %529 = vmatpush.bf16.msra.mxu0 %v490
    %530 = vmatmul.bf16.gmra.mxu0 %v388
    %v531 = vpop.f32.mrf.mxu0
    %v532 = vadd.f32 %v424, %v531
    %v533 = vpop.f32.mrf.mxu0
    %534 = vdwg.mxu0
    %535 = vmatpush.bf16.msra.mxu0 %v505
    %536 = vmatpush.bf16.msra.mxu0 %v504
    %537 = vmatpush.bf16.msra.mxu0 %v503
    %538 = vmatpush.bf16.msra.mxu0 %v502
    %539 = vmatpush.bf16.msra.mxu0 %v501
    %540 = vmatpush.bf16.msra.mxu0 %v500
    %541 = vmatpush.bf16.msra.mxu0 %v499
    %542 = vmatpush.bf16.msra.mxu0 %v498
    %543 = vmatmul.bf16.gmra.mxu0 %v389
    %v544 = vpop.f32.mrf.mxu0
    %v545 = vadd.f32 %v532, %v544
    %v546 = vpop.f32.mrf.mxu0
    %547 = vdwg.mxu0
    %v548 = vtanh.pop %v545
    %v549 = vpack.c.bf16 %v548, %v548
    %550 = vst [vmem:[%s7] sm:$0xf] %v549
    // Predicated region
    $region42: #{ddpg_actor_forward.1} parent=1 // pred_check
      _
    $region43: #{ddpg_actor_forward.1} parent=1 // pred_check_branch
      %552 = sbr.rel (0) target = $region45
    $region44: #{ddpg_actor_forward.1} parent=1 // pred_region
      _
    $region45: #{ddpg_actor_forward.1} parent=1 // pred_fallthru
      _
    // Predicated region
    $region46: #{ddpg_actor_forward.1} parent=1 // pred_check
      _
    $region47: #{ddpg_actor_forward.1} parent=1 // pred_check_branch
      %554 = sbr.rel (0) target = $region49
    $region48: #{ddpg_actor_forward.1} parent=1 // pred_region
      _
    $region49: #{ddpg_actor_forward.1} parent=1 // pred_fallthru
      _
    %555 = vsyncpa [#allocation3], 1
    %556 = vsyncpa [#allocation5], 1

</llo_original>
